<compile_context>
chip_gen: v7x
topology: tpu7x:2x2x1
jax: 0.10.0
libtpu: 0.0.40
codegen_flags: <defaults>
</compile_context>

<pallas_src>
import functools

import numpy as np
import jax
import jax.numpy as jnp
from jax import lax
from jax.experimental import pallas as pl
from jax.experimental.pallas import tpu as pltpu


# --------------------------------------------------------------------------
# main tiled kernel: fg/bg weighted partial sums + voxel mask
# --------------------------------------------------------------------------
def _balancer_kernel(boxes_sm, ranges_sm, loss_ref, dtile_ref,
                     fg_out, bg_out, voxel_ref, fg_scr,
                     *, bin_nums, max_boxes, tile_h, fg_weight, bg_weight):
    b = pl.program_id(0)
    h = pl.program_id(1)
    BINS = bin_nums - 1
    TH = tile_h
    W = loss_ref.shape[-1]
    row0 = h * TH

    # Each (image, row-tile) output block is visited exactly once -> plain init.
    fg_scr[...] = jnp.zeros_like(fg_scr)
    voxel_ref[...] = jnp.zeros_like(voxel_ref)

    # Tiny loop-invariant iotas: outer-product (row x col) box masks and a
    # lane-axis bin iota — no full-tile compares per box.
    rows = row0 + lax.broadcasted_iota(jnp.int32, (1, TH, 1), 1)   # (1,TH,1)
    cols = lax.broadcasted_iota(jnp.int32, (1, 1, W), 2)           # (1,1,W)
    bins = lax.broadcasted_iota(jnp.int32, (1, 1, 1, BINS), 3)     # (1,1,1,BINS)

    @pl.loop(0, max_boxes)
    def _(n):
        bbase = (b * max_boxes + n) * 4
        u1 = boxes_sm[bbase + 0]
        v1 = boxes_sm[bbase + 1]
        u2 = boxes_sm[bbase + 2]
        v2 = boxes_sm[bbase + 3]
        rbase = (b * max_boxes + n) * 2
        left = ranges_sm[rbase + 0]
        right = ranges_sm[rbase + 1]

        live = ((u2 > u1) & (v2 > v1)               # skip zero-area pad boxes
                & (v2 > row0) & (v1 < row0 + TH))   # skip boxes missing this tile

        @pl.when(live)
        def _():
            row_in = (rows >= v1) & (rows < v2)                   # (1,TH,1) bool
            col_in = (cols >= u1) & (cols < u2)                   # (1,1,W)  bool
            in_box_f = (row_in & col_in).astype(jnp.float32)      # (1,TH,W)
            # fg_mask |= box region (rows of this tile only)
            fg_scr[...] = jnp.maximum(fg_scr[...], in_box_f)

            # voxel |= in_box & [left, right).  The torch reference's per-box
            # clear of invalid pixels is deferred to one end-of-tile clear.
            @pl.when(right > left)        # empty-roi boxes arrive as left==right==0
            def _():
                in_box4 = in_box_f[..., None] > 0.0               # (1,TH,W,1) bool
                in_rng4 = (bins >= left) & (bins < right)         # (1,1,1,BINS) bool
                voxel_ref[...] = jnp.where(in_box4 & in_rng4,
                                           jnp.int8(1), voxel_ref[...])

    # Invalid depth pixels (== bin_nums-1 or NaN) never carry voxel bins —
    # exact float equality / NaN-via-(d==d) rely on bins being exact, non-
    # negative integers stored in f32 (same assumption as the torch module).
    d_tile = dtile_ref[...]                                       # (1,TH,W) f32
    valid_t = (d_tile != float(BINS)) & (d_tile == d_tile)
    valid4 = valid_t.astype(jnp.int32)[..., None] != 0            # (1,TH,W,1)
    voxel_ref[...] = jnp.where(valid4, voxel_ref[...], jnp.int8(0))

    # Weighted fg / bg partial sums for this (image, row-tile) block.
    l = loss_ref[...]                                             # (1,TH,W) f32
    fg = fg_scr[...]
    fg_sum = jnp.sum(fg * l)
    bg_sum = jnp.sum(l) - fg_sum                                  # bg = total - fg
    fg_out[...] = jnp.zeros_like(fg_out) + fg_weight * fg_sum
    bg_out[...] = jnp.zeros_like(bg_out) + bg_weight * bg_sum


# --------------------------------------------------------------------------
# XLA pre-pass: per-(image, box) [left, right) depth-bin interval
# --------------------------------------------------------------------------
def _box_bin_ranges(depth_f32, boxes, bin_nums):
    """Masked mean of depth indices inside each box -> [left, right) interval.
    Uses per-box masked f32 reductions (exact for integer bin values well
    below 2^24) rather than a summed-area table, per the review's precision
    note. Truncation toward zero matches python int() because means are >= 0."""
    B, H, W = depth_f32.shape
    BINS = bin_nums - 1
    valid = (depth_f32 != float(BINS)) & ~jnp.isnan(depth_f32)
    d_clean = jnp.where(valid, depth_f32, 0.0)
    valid_f = valid.astype(jnp.float32)

    u1 = boxes[..., 0]
    v1 = boxes[..., 1]
    u2 = boxes[..., 2]
    v2 = boxes[..., 3]
    rows = jnp.arange(H, dtype=jnp.int32)
    cols = jnp.arange(W, dtype=jnp.int32)
    row_in = ((rows[None, None, :] >= v1[..., None])
              & (rows[None, None, :] < v2[..., None])).astype(jnp.float32)  # (B,MB,H)
    col_in = ((cols[None, None, :] >= u1[..., None])
              & (cols[None, None, :] < u2[..., None])).astype(jnp.float32)  # (B,MB,W)

    hi = lax.Precision.HIGHEST
    t_sum = jnp.einsum("bnc,brc->bnr", col_in, d_clean, precision=hi)
    ssum = jnp.einsum("bnr,bnr->bn", row_in, t_sum, precision=hi)
    t_cnt = jnp.einsum("bnc,brc->bnr", col_in, valid_f, precision=hi)
    cnt = jnp.einsum("bnr,bnr->bn", row_in, t_cnt, precision=hi)

    mean_idx = (ssum / jnp.maximum(cnt, 1.0)).astype(jnp.int32)   # trunc toward 0
    left = jnp.maximum(0, mean_idx - 10)
    right = jnp.minimum(BINS, mean_idx + 18)
    nonempty = cnt > 0.0                         # torch "continue" on empty roi
    left = jnp.where(nonempty, left, 0)
    right = jnp.where(nonempty, right, 0)        # left == right -> no bins set
    return jnp.stack([left, right], axis=-1).reshape(-1).astype(jnp.int32)


# --------------------------------------------------------------------------
# generation-aware tiling / VMEM sizing
# --------------------------------------------------------------------------
def _vmem_capacity_bytes():
    try:
        cap = getattr(pltpu.get_tpu_info(), "vmem_capacity_bytes", None)
        if cap:
            return int(cap)
    except Exception:
        pass
    return 64 << 20          # conservative fallback (v7x per-core VMEM)


def _choose_tile_h(H, W, bytes_per_pixel, budget_bytes):
    """Largest row tile TH (multiple of 8 dividing H, or H itself) whose padded
    int8 voxel block fits the per-buffer budget."""
    cands = [th for th in range(8, H + 1, 8) if H % th == 0]
    if H not in cands:
        cands.append(H)
    fitting = [th for th in cands if th * W * bytes_per_pixel <= budget_bytes]
    return max(fitting) if fitting else min(cands)


# --------------------------------------------------------------------------
# wrapper (forward pass of the Balancer module)
# --------------------------------------------------------------------------
def balancer_forward(loss, gt_boxes2d, bin_nums, depth_target,
                     fg_weight, bg_weight, downsample_factor=1, tile_h=None):
    B, H, W = loss.shape
    BINS = bin_nums - 1
    lane_pad = ((BINS + 127) // 128) * 128    # lane-padded width of one voxel row

    # ---- host glue: box preprocessing (downsample/floor/ceil) + dense padding.
    # NOTE: requires concrete gt_boxes2d (ragged python list), like the torch
    # module's python loop — not traceable under jit.
    max_boxes = max(1, max(int(np.asarray(bx).reshape(-1, 4).shape[0])
                           for bx in gt_boxes2d))
    boxes_pad = np.zeros((B, max_boxes, 4), np.int32)  # zero boxes skipped in-kernel
    for i, bx in enumerate(gt_boxes2d):
        bb = np.asarray(bx, np.float32).reshape(-1, 4) / float(downsample_factor)
        bb[:, :2] = np.floor(bb[:, :2])
        bb[:, 2:] = np.ceil(bb[:, 2:])
        boxes_pad[i, : bb.shape[0]] = bb.astype(np.int32)
    # TODO(synk): boxes with negative coords wrap (index from the end) in the
    # torch/numpy slicing reference; here they clamp to the image border.
    boxes_dev = jnp.asarray(boxes_pad)
    boxes_flat = boxes_dev.reshape(-1)

    depth_f32 = depth_target.astype(jnp.float32)

    # Per-box [left, right) bin interval, computed ONCE (not once per row tile),
    # fed to the kernel via scalar prefetch.
    ranges_flat = _box_bin_ranges(depth_f32, boxes_dev, bin_nums)

    # Generation-aware voxel-block budget: ~2 MiB on 64-MiB-VMEM parts (v7x),
    # ~8 MiB on 128-MiB parts (v5e/v6e) to amortize per-grid-step overhead.
    vmem_cap = _vmem_capacity_bytes()
    small_vmem = vmem_cap <= (64 << 20)
    vox_budget = (2 << 20) if small_vmem else (8 << 20)
    TH = _choose_tile_h(H, W, lane_pad, vox_budget) if tile_h is None else tile_h
    assert H % TH == 0 and (TH == H or TH % 8 == 0), "tile_h must divide H (mult of 8)"
    nH = H // TH

    kernel = functools.partial(
        _balancer_kernel, bin_nums=bin_nums, max_boxes=max_boxes, tile_h=TH,
        fg_weight=float(fg_weight), bg_weight=float(bg_weight))

    grid_spec = pltpu.PrefetchScalarGridSpec(
        num_scalar_prefetch=2,                      # boxes + per-box bin ranges
        grid=(B, nH),
        in_specs=[pl.BlockSpec((1, TH, W), lambda b, h, *_: (b, h, 0)),    # loss tile
                  pl.BlockSpec((1, TH, W), lambda b, h, *_: (b, h, 0))],   # depth tile
        out_specs=[pl.BlockSpec((1, 1, 1, 1), lambda b, h, *_: (b, h, 0, 0)),
                   pl.BlockSpec((1, 1, 1, 1), lambda b, h, *_: (b, h, 0, 0)),
                   pl.BlockSpec((1, TH, W, BINS), lambda b, h, *_: (b, h, 0, 0))],
        scratch_shapes=[pltpu.VMEM((1, TH, W), jnp.float32)],
    )

    # Scoped-VMEM estimate with explicit headroom for the per-box 4-D select
    # temporaries (avoid silent spill on v5e's 16 MiB default scoped VMEM).
    vox_blk = TH * W * lane_pad                      # padded int8 block bytes
    vmem_est = (4 * TH * W * 4                       # loss+depth, double-buffered
                + TH * W * 4                         # fg scratch
                + (2 + 4) * vox_blk)                 # 2x-buffered out + temporaries
    vmem_limit = None
    if vmem_est > (12 << 20):                        # only raise when defaults may spill
        cap_limit = (48 << 20) if small_vmem else (100 << 20)
        vmem_limit = int(min(max(vmem_est * 5 // 4, 32 << 20), cap_limit))

    fg_part, bg_part, voxel_i8 = pl.pallas_call(
        kernel,
        out_shape=(jax.ShapeDtypeStruct((B, nH, 1, 1), jnp.float32),
                   jax.ShapeDtypeStruct((B, nH, 1, 1), jnp.float32),
                   jax.ShapeDtypeStruct((B, H, W, BINS), jnp.int8)),
        grid_spec=grid_spec,
        compiler_params=pltpu.CompilerParams(
            dimension_semantics=("parallel", "parallel"),
            vmem_limit_bytes=vmem_limit),
    )(boxes_flat, ranges_flat, loss.astype(jnp.float32), depth_f32)

    num_pixels = float(B * H * W)                    # fg.sum() + bg.sum() == all pixels
    fg_loss = jnp.sum(fg_part) / num_pixels
    bg_loss = jnp.sum(bg_part) / num_pixels
    total = fg_loss + bg_loss
    # TODO(synk): module returns a bool mask; emitting bool directly from the
    # kernel would also remove this one cheap cast pass.
    voxel = voxel_i8.astype(jnp.bool_)
    tb_dict = {"fg_loss": fg_loss, "bg_loss": bg_loss}
    return total, tb_dict, voxel


# ---------------- pure numpy reference (mirrors the torch module) ----------------
def _ref_forward(loss, gt_boxes2d, bin_nums, depth_target,
                 fg_weight, bg_weight, downsample_factor):
    loss = loss.copy()
    B, H, W = loss.shape
    fg = np.zeros((B, H, W), bool)
    voxel = np.zeros((B, H, W, bin_nums - 1), bool)
    for i, bx in enumerate(gt_boxes2d):
        bb = np.asarray(bx, np.float32) / float(downsample_factor)
        bb[:, :2] = np.floor(bb[:, :2])
        bb[:, 2:] = np.ceil(bb[:, 2:])
        bb = bb.astype(np.int64)
        for n in range(bb.shape[0]):
            u1, v1, u2, v2 = bb[n]
            fg[i, v1:v2, u1:u2] = True
            droi = depth_target[i, v1:v2, u1:u2]
            roi_mask = (droi != bin_nums - 1) & ~np.isnan(droi)
            if np.all(~roi_mask):
                continue
            mean_idx = int(droi[roi_mask].astype(np.float32).mean())
            left = max(0, mean_idx - 10)
            right = min(bin_nums - 1, mean_idx + 18)
            voxel[i, v1:v2, u1:u2, left:right] = True
            voxel[i, v1:v2, u1:u2][~roi_mask] = False
    bg = ~fg
    weights = fg_weight * fg + bg_weight * bg
    num_pixels = fg.sum() + bg.sum()
    loss = loss * weights
    fg_loss = loss[fg].sum() / num_pixels
    bg_loss = loss[bg].sum() / num_pixels
    return fg_loss + bg_loss, fg_loss, bg_loss, voxel


if __name__ == "__main__":
    key = jax.random.PRNGKey(0)
    B, H, W = 2, 16, 16
    bin_nums = 81
    fg_w, bg_w, ds = 13.0, 1.0, 2   # deterministic "parameters" of the module

    k1, k2, k3 = jax.random.split(key, 3)
    loss = jax.random.uniform(k1, (B, H, W), jnp.float32)
    depth_target = jax.random.randint(k2, (B, H, W), 0, bin_nums).astype(jnp.float32)
    nan_mask = jax.random.uniform(k3, (B, H, W)) < 0.05
    depth_target = jnp.where(nan_mask, jnp.nan, depth_target)

    # ragged per-image 2D boxes (in original image coords, downsample_factor=2)
    gt_boxes2d = [
        np.array([[2.3, 4.1, 18.7, 20.2],
                  [10.0, 2.0, 30.5, 14.9],
                  [0.0, 20.0, 8.0, 31.0]], np.float32),
        np.array([[5.5, 6.5, 25.0, 28.0],
                  [16.2, 1.1, 31.9, 12.3]], np.float32),
    ]

    ref_total, ref_fg, ref_bg, ref_voxel = _ref_forward(
        np.asarray(loss), gt_boxes2d, bin_nums, np.asarray(depth_target),
        fg_w, bg_w, ds)

    # tile_h=8 exercises the H-tiled / per-tile-partial code path (grid = (2, 2));
    # the second call uses the generation-aware auto tile (TH == H here).
    for th in (8, None):
        total, tb, voxel = balancer_forward(loss, gt_boxes2d, bin_nums,
                                            depth_target, fg_w, bg_w, ds,
                                            tile_h=th)
        jax.block_until_ready((total, tb["fg_loss"], tb["bg_loss"], voxel))

        assert np.allclose(float(total), ref_total, rtol=1e-4, atol=1e-6)
        assert np.allclose(float(tb["fg_loss"]), ref_fg, rtol=1e-4, atol=1e-6)
        assert np.allclose(float(tb["bg_loss"]), ref_bg, rtol=1e-4, atol=1e-6)
        assert np.array_equal(np.asarray(voxel), ref_voxel)

    print("KERNEL_OK")
</pallas_src>

<mosaic_0001>
module attributes {stable_mosaic.version = 11 : i64} {
  func.func @_balancer_kernel(%arg0: i32, %arg1: i32, %arg2: memref<24xi32, #tpu.memory_space<smem>>, %arg3: memref<12xi32, #tpu.memory_space<smem>>, %arg4: memref<1x8x16xf32, #tpu.memory_space<vmem>>, %arg5: memref<1x8x16xf32, #tpu.memory_space<vmem>>, %arg6: memref<1x1x1x1xf32, #tpu.memory_space<vmem>>, %arg7: memref<1x1x1x1xf32, #tpu.memory_space<vmem>>, %arg8: memref<1x8x16x80xi8, #tpu.memory_space<vmem>>, %arg9: memref<1x8x16xf32, #tpu.memory_space<vmem>>) attributes {dimension_semantics = [#tpu.dimension_semantics<parallel>, #tpu.dimension_semantics<parallel>], iteration_bounds = array<i64: 2, 2>, scalar_prefetch = 2 : i64, scratch_operands = 1 : i64, tpu.core_type = #tpu.core_type<tc>, window_params = [{transform_indices = @transform_0, window_bounds = array<i64: 1, 8, 16>}, {transform_indices = @transform_1, window_bounds = array<i64: 1, 8, 16>}, {transform_indices = @transform_2, window_bounds = array<i64: 1, 1, 1, 1>}, {transform_indices = @transform_3, window_bounds = array<i64: 1, 1, 1, 1>}, {transform_indices = @transform_4, window_bounds = array<i64: 1, 8, 16, 80>}]} {
    %c8_i32 = arith.constant 8 : i32
    %0 = arith.muli %arg1, %c8_i32 : i32
    %cst = arith.constant 0.000000e+00 : f32
    %1 = vector.broadcast %cst : f32 to vector<1x8x16xf32>
    %c0 = arith.constant 0 : index
    %c0_0 = arith.constant 0 : index
    %c0_1 = arith.constant 0 : index
    %2 = vector.load %arg9[%c0, %c0_0, %c0_1] : memref<1x8x16xf32, #tpu.memory_space<vmem>>, vector<1x8x16xf32>
    tpu.vector_store %arg9[%c0, %c0_0, %c0_1], %1 {strides = array<i32>} : memref<1x8x16xf32, #tpu.memory_space<vmem>>, vector<1x8x16xf32>,
    %c0_i8 = arith.constant 0 : i8
    %3 = vector.broadcast %c0_i8 : i8 to vector<1x8x16x80xi8>
    %c0_2 = arith.constant 0 : index
    %c0_3 = arith.constant 0 : index
    %c0_4 = arith.constant 0 : index
    %c0_5 = arith.constant 0 : index
    %4 = vector.load %arg8[%c0_2, %c0_3, %c0_4, %c0_5] : memref<1x8x16x80xi8, #tpu.memory_space<vmem>>, vector<1x8x16x80xi8>
    tpu.vector_store %arg8[%c0_2, %c0_3, %c0_4, %c0_5], %3 {strides = array<i32>} : memref<1x8x16x80xi8, #tpu.memory_space<vmem>>, vector<1x8x16x80xi8>,
    %5 = tpu.iota {dimensions = array<i32: 1>} : vector<1x8x1xi32>
    %6 = vector.broadcast %0 : i32 to vector<1x8x1xi32>
    %7 = arith.addi %6, %5 : vector<1x8x1xi32>
    %8 = tpu.iota {dimensions = array<i32: 2>} : vector<1x1x16xi32>
    %9 = tpu.iota {dimensions = array<i32: 3>} : vector<1x1x1x80xi32>
    %c0_i32 = arith.constant 0 : i32
    %c3_i32 = arith.constant 3 : i32
    %10 = arith.addi %c0_i32, %c3_i32 : i32
    %c1_i32 = arith.constant 1 : i32
    scf.for %arg10 = %c0_i32 to %10 step %c1_i32  : i32 {
      %c1_i32_41 = arith.constant 1 : i32
      %48 = arith.muli %arg10, %c1_i32_41 : i32
      %c0_i32_42 = arith.constant 0 : i32
      %49 = arith.addi %c0_i32_42, %48 : i32
      %c3_i32_43 = arith.constant 3 : i32
      %50 = arith.muli %arg0, %c3_i32_43 : i32
      %51 = arith.addi %50, %49 : i32
      %c4_i32 = arith.constant 4 : i32
      %52 = arith.muli %51, %c4_i32 : i32
      %c0_i32_44 = arith.constant 0 : i32
      %53 = arith.addi %52, %c0_i32_44 : i32
      %54 = arith.index_cast %53 : i32 to index
      %55 = memref.load %arg2[%54] : memref<24xi32, #tpu.memory_space<smem>>
      %c1_i32_45 = arith.constant 1 : i32
      %56 = arith.addi %52, %c1_i32_45 : i32
      %57 = arith.index_cast %56 : i32 to index
      %58 = memref.load %arg2[%57] : memref<24xi32, #tpu.memory_space<smem>>
      %c2_i32 = arith.constant 2 : i32
      %59 = arith.addi %52, %c2_i32 : i32
      %60 = arith.index_cast %59 : i32 to index
      %61 = memref.load %arg2[%60] : memref<24xi32, #tpu.memory_space<smem>>
      %c3_i32_46 = arith.constant 3 : i32
      %62 = arith.addi %52, %c3_i32_46 : i32
      %63 = arith.index_cast %62 : i32 to index
      %64 = memref.load %arg2[%63] : memref<24xi32, #tpu.memory_space<smem>>
      %c3_i32_47 = arith.constant 3 : i32
      %65 = arith.muli %arg0, %c3_i32_47 : i32
      %66 = arith.addi %65, %49 : i32
      %c2_i32_48 = arith.constant 2 : i32
      %67 = arith.muli %66, %c2_i32_48 : i32
      %c0_i32_49 = arith.constant 0 : i32
      %68 = arith.addi %67, %c0_i32_49 : i32
      %69 = arith.index_cast %68 : i32 to index
      %70 = memref.load %arg3[%69] : memref<12xi32, #tpu.memory_space<smem>>
      %c1_i32_50 = arith.constant 1 : i32
      %71 = arith.addi %67, %c1_i32_50 : i32
      %72 = arith.index_cast %71 : i32 to index
      %73 = memref.load %arg3[%72] : memref<12xi32, #tpu.memory_space<smem>>
      %74 = arith.cmpi sgt, %61, %55 : i32
      %75 = arith.cmpi sgt, %64, %58 : i32
      %76 = arith.andi %74, %75 : i1
      %77 = arith.cmpi sgt, %64, %0 : i32
      %78 = arith.andi %76, %77 : i1
      %c8_i32_51 = arith.constant 8 : i32
      %79 = arith.addi %0, %c8_i32_51 : i32
      %80 = arith.cmpi slt, %58, %79 : i32
      %81 = arith.andi %78, %80 : i1
      %82 = arith.extui %81 : i1 to i32
      %c0_i32_52 = arith.constant 0 : i32
      %83 = arith.cmpi ne, %82, %c0_i32_52 : i32
      scf.if %83 {
        %84 = vector.broadcast %58 : i32 to vector<1x8x1xi32>
        %85 = arith.cmpi sge, %7, %84 : vector<1x8x1xi32>
        %86 = vector.broadcast %64 : i32 to vector<1x8x1xi32>
        %87 = arith.cmpi slt, %7, %86 : vector<1x8x1xi32>
        %88 = arith.andi %85, %87 : vector<1x8x1xi1>
        %89 = vector.broadcast %55 : i32 to vector<1x1x16xi32>
        %90 = arith.cmpi sge, %8, %89 : vector<1x1x16xi32>
        %91 = vector.broadcast %61 : i32 to vector<1x1x16xi32>
        %92 = arith.cmpi slt, %8, %91 : vector<1x1x16xi32>
        %93 = arith.andi %90, %92 : vector<1x1x16xi1>
        %94 = vector.broadcast %88 : vector<1x8x1xi1> to vector<1x8x16xi1>
        %95 = vector.broadcast %93 : vector<1x1x16xi1> to vector<1x8x16xi1>
        %96 = arith.andi %94, %95 : vector<1x8x16xi1>
        %97 = arith.extui %96 : vector<1x8x16xi1> to vector<1x8x16xi32>
        %98 = arith.sitofp %97 : vector<1x8x16xi32> to vector<1x8x16xf32>
        %c0_53 = arith.constant 0 : index
        %c0_54 = arith.constant 0 : index
        %c0_55 = arith.constant 0 : index
        %99 = vector.load %arg9[%c0_53, %c0_54, %c0_55] : memref<1x8x16xf32, #tpu.memory_space<vmem>>, vector<1x8x16xf32>
        %100 = arith.maximumf %99, %98 : vector<1x8x16xf32>
        %c0_56 = arith.constant 0 : index
        %c0_57 = arith.constant 0 : index
        %c0_58 = arith.constant 0 : index
        %101 = vector.load %arg9[%c0_56, %c0_57, %c0_58] : memref<1x8x16xf32, #tpu.memory_space<vmem>>, vector<1x8x16xf32>
        tpu.vector_store %arg9[%c0_56, %c0_57, %c0_58], %100 {strides = array<i32>} : memref<1x8x16xf32, #tpu.memory_space<vmem>>, vector<1x8x16xf32>,
        %102 = arith.cmpi sgt, %73, %70 : i32
        %103 = arith.extui %102 : i1 to i32
        %c0_i32_59 = arith.constant 0 : i32
        %104 = arith.cmpi ne, %103, %c0_i32_59 : i32
        scf.if %104 {
          %105 = vector.shape_cast %98 : vector<1x8x16xf32> to vector<1x8x16x1xf32>
          %cst_60 = arith.constant 0.000000e+00 : f32
          %106 = vector.broadcast %cst_60 : f32 to vector<1x8x16x1xf32>
          %107 = arith.cmpf ogt, %105, %106 : vector<1x8x16x1xf32>
          %108 = vector.broadcast %70 : i32 to vector<1x1x1x80xi32>
          %109 = arith.cmpi sge, %9, %108 : vector<1x1x1x80xi32>
          %110 = vector.broadcast %73 : i32 to vector<1x1x1x80xi32>
          %111 = arith.cmpi slt, %9, %110 : vector<1x1x1x80xi32>
          %112 = arith.andi %109, %111 : vector<1x1x1x80xi1>
          %113 = vector.broadcast %107 : vector<1x8x16x1xi1> to vector<1x8x16x80xi1>
          %114 = vector.broadcast %112 : vector<1x1x1x80xi1> to vector<1x8x16x80xi1>
          %115 = arith.andi %113, %114 : vector<1x8x16x80xi1>
          %c0_61 = arith.constant 0 : index
          %c0_62 = arith.constant 0 : index
          %c0_63 = arith.constant 0 : index
          %c0_64 = arith.constant 0 : index
          %116 = vector.load %arg8[%c0_61, %c0_62, %c0_63, %c0_64] : memref<1x8x16x80xi8, #tpu.memory_space<vmem>>, vector<1x8x16x80xi8>
          %c1_i8 = arith.constant 1 : i8
          %117 = vector.broadcast %c1_i8 : i8 to vector<1x8x16x80xi8>
          %118 = arith.select %115, %117, %116 : vector<1x8x16x80xi1>, vector<1x8x16x80xi8>
          %c0_65 = arith.constant 0 : index
          %c0_66 = arith.constant 0 : index
          %c0_67 = arith.constant 0 : index
          %c0_68 = arith.constant 0 : index
          %119 = vector.load %arg8[%c0_65, %c0_66, %c0_67, %c0_68] : memref<1x8x16x80xi8, #tpu.memory_space<vmem>>, vector<1x8x16x80xi8>
          tpu.vector_store %arg8[%c0_65, %c0_66, %c0_67, %c0_68], %118 {strides = array<i32>} : memref<1x8x16x80xi8, #tpu.memory_space<vmem>>, vector<1x8x16x80xi8>,
        } else {
        }
      } else {
      }
    }
    %c3_i32_6 = arith.constant 3 : i32
    %c0_7 = arith.constant 0 : index
    %c0_8 = arith.constant 0 : index
    %c0_9 = arith.constant 0 : index
    %11 = vector.load %arg5[%c0_7, %c0_8, %c0_9] : memref<1x8x16xf32, #tpu.memory_space<vmem>>, vector<1x8x16xf32>
    %cst_10 = arith.constant 8.000000e+01 : f32
    %12 = vector.broadcast %cst_10 : f32 to vector<1x8x16xf32>
    %13 = arith.cmpf one, %11, %12 : vector<1x8x16xf32>
    %14 = arith.cmpf oeq, %11, %11 : vector<1x8x16xf32>
    %15 = arith.andi %13, %14 : vector<1x8x16xi1>
    %16 = arith.extui %15 : vector<1x8x16xi1> to vector<1x8x16xi32>
    %17 = vector.shape_cast %16 : vector<1x8x16xi32> to vector<1x8x16x1xi32>
    %c0_i32_11 = arith.constant 0 : i32
    %18 = vector.broadcast %c0_i32_11 : i32 to vector<1x8x16x1xi32>
    %19 = arith.cmpi ne, %17, %18 : vector<1x8x16x1xi32>
    %c0_12 = arith.constant 0 : index
    %c0_13 = arith.constant 0 : index
    %c0_14 = arith.constant 0 : index
    %c0_15 = arith.constant 0 : index
    %20 = vector.load %arg8[%c0_12, %c0_13, %c0_14, %c0_15] : memref<1x8x16x80xi8, #tpu.memory_space<vmem>>, vector<1x8x16x80xi8>
    %c0_i8_16 = arith.constant 0 : i8
    %21 = vector.shape_cast %19 : vector<1x8x16x1xi1> to vector<1x8x16x1xi1>
    %22 = vector.broadcast %21 : vector<1x8x16x1xi1> to vector<1x8x16x80xi1>
    %23 = vector.broadcast %c0_i8_16 : i8 to vector<1x8x16x80xi8>
    %24 = arith.select %22, %20, %23 : vector<1x8x16x80xi1>, vector<1x8x16x80xi8>
    %c0_17 = arith.constant 0 : index
    %c0_18 = arith.constant 0 : index
    %c0_19 = arith.constant 0 : index
    %c0_20 = arith.constant 0 : index
    %25 = vector.load %arg8[%c0_17, %c0_18, %c0_19, %c0_20] : memref<1x8x16x80xi8, #tpu.memory_space<vmem>>, vector<1x8x16x80xi8>
    tpu.vector_store %arg8[%c0_17, %c0_18, %c0_19, %c0_20], %24 {strides = array<i32>} : memref<1x8x16x80xi8, #tpu.memory_space<vmem>>, vector<1x8x16x80xi8>,
    %c0_21 = arith.constant 0 : index
    %c0_22 = arith.constant 0 : index
    %c0_23 = arith.constant 0 : index
    %26 = vector.load %arg4[%c0_21, %c0_22, %c0_23] : memref<1x8x16xf32, #tpu.memory_space<vmem>>, vector<1x8x16xf32>
    %c0_24 = arith.constant 0 : index
    %c0_25 = arith.constant 0 : index
    %c0_26 = arith.constant 0 : index
    %27 = vector.load %arg9[%c0_24, %c0_25, %c0_26] : memref<1x8x16xf32, #tpu.memory_space<vmem>>, vector<1x8x16xf32>
    %28 = arith.mulf %27, %26 : vector<1x8x16xf32>
    %29 = vector.shape_cast %28 : vector<1x8x16xf32> to vector<1x1x8x16xf32>
    %cst_27 = arith.constant dense<0.000000e+00> : vector<1xf32>
    %30 = vector.multi_reduction <add>, %29, %cst_27 [1, 2, 3] : vector<1x1x8x16xf32> to vector<1xf32>
    %31 = vector.shape_cast %30 : vector<1xf32> to vector<1x1x1x1xf32>
    %32 = vector.extract %31[0, 0, 0, 0] : f32 from vector<1x1x1x1xf32>
    %33 = vector.shape_cast %26 : vector<1x8x16xf32> to vector<1x1x8x16xf32>
    %cst_28 = arith.constant dense<0.000000e+00> : vector<1xf32>
    %34 = vector.multi_reduction <add>, %33, %cst_28 [1, 2, 3] : vector<1x1x8x16xf32> to vector<1xf32>
    %35 = vector.shape_cast %34 : vector<1xf32> to vector<1x1x1x1xf32>
    %36 = vector.extract %35[0, 0, 0, 0] : f32 from vector<1x1x1x1xf32>
    %37 = arith.subf %36, %32 : f32
    %cst_29 = arith.constant 0.000000e+00 : f32
    %38 = vector.broadcast %cst_29 : f32 to vector<1x1x1x1xf32>
    %cst_30 = arith.constant 1.300000e+01 : f32
    %39 = arith.mulf %cst_30, %32 : f32
    %40 = vector.broadcast %39 : f32 to vector<1x1x1x1xf32>
    %41 = arith.addf %38, %40 : vector<1x1x1x1xf32>
    %c0_31 = arith.constant 0 : index
    %c0_32 = arith.constant 0 : index
    %c0_33 = arith.constant 0 : index
    %c0_34 = arith.constant 0 : index
    %42 = vector.load %arg6[%c0_31, %c0_32, %c0_33, %c0_34] : memref<1x1x1x1xf32, #tpu.memory_space<vmem>>, vector<1x1x1x1xf32>
    tpu.vector_store %arg6[%c0_31, %c0_32, %c0_33, %c0_34], %41 {strides = array<i32>} : memref<1x1x1x1xf32, #tpu.memory_space<vmem>>, vector<1x1x1x1xf32>,
    %cst_35 = arith.constant 0.000000e+00 : f32
    %43 = vector.broadcast %cst_35 : f32 to vector<1x1x1x1xf32>
    %cst_36 = arith.constant 1.000000e+00 : f32
    %44 = arith.mulf %cst_36, %37 : f32
    %45 = vector.broadcast %44 : f32 to vector<1x1x1x1xf32>
    %46 = arith.addf %43, %45 : vector<1x1x1x1xf32>
    %c0_37 = arith.constant 0 : index
    %c0_38 = arith.constant 0 : index
    %c0_39 = arith.constant 0 : index
    %c0_40 = arith.constant 0 : index
    %47 = vector.load %arg7[%c0_37, %c0_38, %c0_39, %c0_40] : memref<1x1x1x1xf32, #tpu.memory_space<vmem>>, vector<1x1x1x1xf32>
    tpu.vector_store %arg7[%c0_37, %c0_38, %c0_39, %c0_40], %46 {strides = array<i32>} : memref<1x1x1x1xf32, #tpu.memory_space<vmem>>, vector<1x1x1x1xf32>,
    return
  }
  func.func @transform_0(%arg0: i32, %arg1: i32, %arg2: memref<24xi32, #tpu.memory_space<smem>>, %arg3: memref<12xi32, #tpu.memory_space<smem>>) -> (i32, i32, i32) {
    %c0_i32 = arith.constant 0 : i32
    %c0_i32_0 = arith.constant 0 : i32
    return %arg0, %arg1, %c0_i32 : i32, i32, i32
  }
  func.func @transform_1(%arg0: i32, %arg1: i32, %arg2: memref<24xi32, #tpu.memory_space<smem>>, %arg3: memref<12xi32, #tpu.memory_space<smem>>) -> (i32, i32, i32) {
    %c0_i32 = arith.constant 0 : i32
    %c0_i32_0 = arith.constant 0 : i32
    return %arg0, %arg1, %c0_i32 : i32, i32, i32
  }
  func.func @transform_2(%arg0: i32, %arg1: i32, %arg2: memref<24xi32, #tpu.memory_space<smem>>, %arg3: memref<12xi32, #tpu.memory_space<smem>>) -> (i32, i32, i32, i32) {
    %c0_i32 = arith.constant 0 : i32
    %c0_i32_0 = arith.constant 0 : i32
    %c0_i32_1 = arith.constant 0 : i32
    return %arg0, %arg1, %c0_i32, %c0_i32_0 : i32, i32, i32, i32
  }
  func.func @transform_3(%arg0: i32, %arg1: i32, %arg2: memref<24xi32, #tpu.memory_space<smem>>, %arg3: memref<12xi32, #tpu.memory_space<smem>>) -> (i32, i32, i32, i32) {
    %c0_i32 = arith.constant 0 : i32
    %c0_i32_0 = arith.constant 0 : i32
    %c0_i32_1 = arith.constant 0 : i32
    return %arg0, %arg1, %c0_i32, %c0_i32_0 : i32, i32, i32, i32
  }
  func.func @transform_4(%arg0: i32, %arg1: i32, %arg2: memref<24xi32, #tpu.memory_space<smem>>, %arg3: memref<12xi32, #tpu.memory_space<smem>>) -> (i32, i32, i32, i32) {
    %c0_i32 = arith.constant 0 : i32
    %c0_i32_0 = arith.constant 0 : i32
    %c0_i32_1 = arith.constant 0 : i32
    return %arg0, %arg1, %c0_i32, %c0_i32_0 : i32, i32, i32, i32
  }
}

</mosaic_0001>

<llo_original>
// kernel: tpu_custom_call.1
$region0: #{tpu_custom_call.1}
  #allocation0 [shape = 'u32[]', space=smem, size = 0x4, offset = 0x4, fixed_abs, tag = 'smem constant byte address 0x4 - core index']
  #allocation1 [shape = 'u32[144,128]{1,0:T(1,128)}', space=vmem, size = 0x12000, scoped, tag = 'internal scratch']
  #allocation2 [shape = 'f32[1,8,16]{2,1,0:T(8,128)}', space=vmem, size = 0x1000, scoped, tag = 'scratch operand']
  #allocation3 [shape = 's32[1]{0}', space=sflag, size = 0x4, scoped, tag = 'scoped memory for tpu_custom_call.1']
  #allocation4 [shape = 'u8[512]{0}', space=smem, size = 0x200, scoped, tag = 'prefetched SMEM operand 0']
  #allocation5 [shape = 'u8[512]{0}', space=smem, size = 0x200, scoped, tag = 'prefetched SMEM operand 1']
  %s0 = inlined_call_operand.hbm [shape: s32[24], index: 0, kind: input, shape index: {}]
  %s1 = inlined_call_operand.vmem [shape: s32[12], index: 1, kind: input, shape index: {}]
  %s2 = inlined_call_operand.hbm [shape: f32[2,16,16], index: 2, kind: input, shape index: {}]
  %s3 = inlined_call_operand.hbm [shape: f32[2,16,16], index: 3, kind: input, shape index: {}]
  %s4 = inlined_call_operand.vmem [shape: f32[2,2,1,1], index: 4, kind: output, shape index: {0}]
  %s5 = inlined_call_operand.vmem [shape: f32[2,2,1,1], index: 5, kind: output, shape index: {1}]
  %s6 = inlined_call_operand.hbm [shape: s8[2,16,16,80], index: 6, kind: output, shape index: {2}]
  %7 = xla_tuple %s4, %s5, %s6
  %s8 = sld [smem:[#allocation0]]
  $region80: #{tpu_custom_call.1} parent=0
    _
  %s10 = ssub.s32 1, %s8
  %s11 = scalar_select 0, %s10, %s8
  %13 = dma.hbm_to_smem %s0, 16, [#allocation4], [#allocation3]
  %s14 = sshll.u32 %s1, 4
  %s15 = int_to_ptr.vmem [resolvable:$true] %s14
  %17 = dma.vmem_to_smem %s15, 16, [#allocation5], [#allocation3]
  %18 = dma.done [#allocation3], 32
  %19 = sfence
  $region1: #{tpu_custom_call.1} parent=0
    #allocation6 [shape = 'u8[8192]{0}', space=vmem, size = 0x2000, scoped, tag = 'input window, operand 2']
    #allocation7 [shape = 's32[2]{0}', space=sflag, size = 0x8, scoped, tag = 'scoped memory for tpu_custom_call.1']
    #allocation8 [shape = 's32[2]{0}', space=sflag, size = 0x8, scoped, tag = 'scoped memory for tpu_custom_call.1']
    #allocation9 [shape = 'u8[8192]{0}', space=vmem, size = 0x2000, scoped, tag = 'input window, operand 3']
    #allocation10 [shape = 's32[2]{0}', space=sflag, size = 0x8, scoped, tag = 'scoped memory for tpu_custom_call.1']
    #allocation11 [shape = 'u8[32768]{0}', space=vmem, size = 0x8000, scoped, tag = 'output window, operand 2']
    %20 = vsyncpa [#allocation7], 0
    %s21 = scalar_lea.sflag [#allocation7], 1
    %22 = vsyncpa %s21, 0
    %23 = vsyncpa [#allocation10], 0
    %s24 = scalar_lea.sflag [#allocation10], 1
    %25 = vsyncpa %s24, 0
    %26 = vsyncpa [#allocation8], 0
    %s27 = scalar_lea.sflag [#allocation8], 1
    %28 = vsyncpa %s27, 0
    loop: start=0, step=1, limit=6
    $region2: #{tpu_custom_call.1} parent=1 // loop_pre_header
      _
    $region3: #{tpu_custom_call.1} parent=1 // loop_header
      %s30 = sphi 0, %s34
      %p31 = scmp.ge.s32.totalorder %s30, 6
      %s37 = sphi 0, %s49
      %s38 = sphi 0, %s45
      %s39 = sphi 0, %s37
      %s40 = sphi 0, %s38
      %s41 = sphi 0, %s39
      %s42 = sphi 0, %s40
      %s54 = sphi 0, %s56
      %s57 = sphi 0, %s54
      %s58 = sphi 0, %s57
      %s74 = sphi 0, %s58
      %s82 = sphi 0, %s84
      %s85 = sphi 0, %s82
      %s86 = sphi 0, %s85
      %s102 = sphi 0, %s86
      %s110 = sphi 0, %s112
      %s113 = sphi 0, %s110
      %s114 = sphi 0, %s113
      %s130 = sphi 0, %s114
      %s138 = sphi 0, %s140
      %s141 = sphi 0, %s138
      %s142 = sphi 0, %s141
      %s158 = sphi 0, %s142
      %s166 = sphi 0, %s168
      %s169 = sphi 0, %s166
      %s170 = sphi 0, %s169
      %s186 = sphi 0, %s170
    $region4: #{tpu_custom_call.1} parent=1 // loop_header_branch
      %33 = sbr.rel (%p31) target = $region8
    $region5: #{tpu_custom_call.1} parent=1 // loop_body
      %s35 = ssub.s32 %s30, 1
      %s36 = ssub.s32 %s30, 2
      %s43 = sadd.s32 1, %s38
      %p44 = scmp.ge.s32.totalorder %s43, 2
      %s45 = scalar_select %p44, 0, %s43
      %s46 = sadd.s32 1, %s37
      %s47 = scalar_select %p44, %s46, %s37
      %p48 = scmp.ge.s32.totalorder %s47, 2
      %s49 = scalar_select %p48, 0, %s47
      %s50 = ssub.s32 %s37, %s49
      %s51 = ssub.s32 %s38, %s45
      %s52 = sor.u32 %s50, %s51
      %p53 = scmp.eq.s32.totalorder %s52, 0
      %s55 = sadd.s32 %s54, 1
      %s56 = scalar_select %p53, %s54, %s55
      %p59 = pneg %p53
      %p60 = scmp.eq.s32.totalorder %s30, 3
      %p61 = por %p59, %p60
      %p62 = scmp.ne.s32.totalorder %s54, %s57
      %p63 = scmp.eq.s32.totalorder %s30, 0
      %p64 = por %p62, %p63
      %p65 = scmp.ne.s32.totalorder %s54, %s57
      %p66 = scmp.eq.s32.totalorder %s35, 3
      %p67 = por %p65, %p66
      %p68 = scmp.ne.s32.totalorder %s57, %s58
      %p69 = scmp.eq.s32.totalorder %s35, 0
      %p70 = por %p68, %p69
      %p71 = scmp.ne.s32.totalorder %s57, %s58
      %p72 = scmp.eq.s32.totalorder %s36, 3
      %p73 = por %p71, %p72
      %p75 = scmp.ne.s32.totalorder %s58, %s74
      %p76 = scmp.eq.s32.totalorder %s36, 0
      %p77 = por %p75, %p76
      %s78 = ssub.s32 %s37, %s49
      %s79 = ssub.s32 %s38, %s45
      %s80 = sor.u32 %s78, %s79
      %p81 = scmp.eq.s32.totalorder %s80, 0
      %s83 = sadd.s32 %s82, 1
      %s84 = scalar_select %p81, %s82, %s83
      %p87 = pneg %p81
      %p88 = scmp.eq.s32.totalorder %s30, 3
      %p89 = por %p87, %p88
      %p90 = scmp.ne.s32.totalorder %s82, %s85
      %p91 = scmp.eq.s32.totalorder %s30, 0
      %p92 = por %p90, %p91
      %p93 = scmp.ne.s32.totalorder %s82, %s85
      %p94 = scmp.eq.s32.totalorder %s35, 3
      %p95 = por %p93, %p94
      %p96 = scmp.ne.s32.totalorder %s85, %s86
      %p97 = scmp.eq.s32.totalorder %s35, 0
      %p98 = por %p96, %p97
      %p99 = scmp.ne.s32.totalorder %s85, %s86
      %p100 = scmp.eq.s32.totalorder %s36, 3
      %p101 = por %p99, %p100
      %p103 = scmp.ne.s32.totalorder %s86, %s102
      %p104 = scmp.eq.s32.totalorder %s36, 0
      %p105 = por %p103, %p104
      %s106 = ssub.s32 %s37, %s49
      %s107 = ssub.s32 %s38, %s45
      %s108 = sor.u32 %s106, %s107
      %p109 = scmp.eq.s32.totalorder %s108, 0
      %s111 = sadd.s32 %s110, 1
      %s112 = scalar_select %p109, %s110, %s111
      %p115 = pneg %p109
      %p116 = scmp.eq.s32.totalorder %s30, 3
      %p117 = por %p115, %p116
      %p118 = scmp.ne.s32.totalorder %s110, %s113
      %p119 = scmp.eq.s32.totalorder %s30, 0
      %p120 = por %p118, %p119
      %p121 = scmp.ne.s32.totalorder %s110, %s113
      %p122 = scmp.eq.s32.totalorder %s35, 3
      %p123 = por %p121, %p122
      %p124 = scmp.ne.s32.totalorder %s113, %s114
      %p125 = scmp.eq.s32.totalorder %s35, 0
      %p126 = por %p124, %p125
      %p127 = scmp.ne.s32.totalorder %s113, %s114
      %p128 = scmp.eq.s32.totalorder %s36, 3
      %p129 = por %p127, %p128
      %p131 = scmp.ne.s32.totalorder %s114, %s130
      %p132 = scmp.eq.s32.totalorder %s36, 0
      %p133 = por %p131, %p132
      %s134 = ssub.s32 %s37, %s49
      %s135 = ssub.s32 %s38, %s45
      %s136 = sor.u32 %s134, %s135
      %p137 = scmp.eq.s32.totalorder %s136, 0
      %s139 = sadd.s32 %s138, 1
      %s140 = scalar_select %p137, %s138, %s139
      %p143 = pneg %p137
      %p144 = scmp.eq.s32.totalorder %s30, 3
      %p145 = por %p143, %p144
      %p146 = scmp.ne.s32.totalorder %s138, %s141
      %p147 = scmp.eq.s32.totalorder %s30, 0
      %p148 = por %p146, %p147
      %p149 = scmp.ne.s32.totalorder %s138, %s141
      %p150 = scmp.eq.s32.totalorder %s35, 3
      %p151 = por %p149, %p150
      %p152 = scmp.ne.s32.totalorder %s141, %s142
      %p153 = scmp.eq.s32.totalorder %s35, 0
      %p154 = por %p152, %p153
      %p155 = scmp.ne.s32.totalorder %s141, %s142
      %p156 = scmp.eq.s32.totalorder %s36, 3
      %p157 = por %p155, %p156
      %p159 = scmp.ne.s32.totalorder %s142, %s158
      %p160 = scmp.eq.s32.totalorder %s36, 0
      %p161 = por %p159, %p160
      %s162 = ssub.s32 %s37, %s49
      %s163 = ssub.s32 %s38, %s45
      %s164 = sor.u32 %s162, %s163
      %p165 = scmp.eq.s32.totalorder %s164, 0
      %s167 = sadd.s32 %s166, 1
      %s168 = scalar_select %p165, %s166, %s167
      %p171 = pneg %p165
      %p172 = scmp.eq.s32.totalorder %s30, 3
      %p173 = por %p171, %p172
      %p174 = scmp.ne.s32.totalorder %s166, %s169
      %p175 = scmp.eq.s32.totalorder %s30, 0
      %p176 = por %p174, %p175
      %p177 = scmp.ne.s32.totalorder %s166, %s169
      %p178 = scmp.eq.s32.totalorder %s35, 3
      %p179 = por %p177, %p178
      %p180 = scmp.ne.s32.totalorder %s169, %s170
      %p181 = scmp.eq.s32.totalorder %s35, 0
      %p182 = por %p180, %p181
      %p183 = scmp.ne.s32.totalorder %s169, %s170
      %p184 = scmp.eq.s32.totalorder %s36, 3
      %p185 = por %p183, %p184
      %p187 = scmp.ne.s32.totalorder %s170, %s186
      %p188 = scmp.eq.s32.totalorder %s36, 0
      %p189 = por %p187, %p188
      %p190 = scmp.le.s32.totalorder 1, %s30
      %p191 = scmp.lt.s32.totalorder %s30, 5
      %p192 = pnand %p190, %p191
      %p193 = pneg %p192
      // Predicated region
      $region9: #{tpu_custom_call.1} parent=5 // pred_check
        _
      $region10: #{tpu_custom_call.1} parent=5 // pred_check_branch
        %195 = sbr.rel (%p192) target = $region12
      $region11: #{tpu_custom_call.1} parent=5 // pred_region
        %s196 = ssub.s32 %s30, 1
      $region12: #{tpu_custom_call.1} parent=5 // pred_fallthru
        _
      %p197 = scmp.lt.s32.totalorder %s30, 4
      // Predicated region
      $region13: #{tpu_custom_call.1} parent=5 // pred_check
        %p198 = pneg %p197
      $region14: #{tpu_custom_call.1} parent=5 // pred_check_branch
        %200 = sbr.rel (%p198) target = $region16
      $region15: #{tpu_custom_call.1} parent=5 // pred_region
        // Predicated region
        $region17: #{tpu_custom_call.1} parent=15 // pred_check
          %p201 = pneg %p64
        $region18: #{tpu_custom_call.1} parent=15 // pred_check_branch
          %203 = sbr.rel (%p201) target = $region20
        $region19: #{tpu_custom_call.1} parent=15 // pred_region
          %s204 = sand.u32 %s54, 1
          %s205 = scalar_lea.sflag [#allocation7], %s204
          %s206 = sand.u32 %s54, 1
          %s207 = smul.addr %s206, 8
          %s208 = scalar_lea.vmem [#allocation6], %s207
          %s210 = ssub.s32 128, 128
          %211 = vsyncadd %s205, %s210
          %s212 = smul.addr %s37, 2
          %s213 = sadd.s32 %s38, %s212
          %s214 = smul.addr %s213, 128
          %s215 = scalar_lea.hbm %s2, %s214
          %s217 = sshll.u32 %s208, 4
          %s218 = int_to_ptr.vmem [resolvable:$true] %s217
          %220 = dma.hbm_to_vmem [thread:$0]  %s215, 128, %s218, %s205
        $region20: #{tpu_custom_call.1} parent=15 // pred_fallthru
          _
        // Predicated region
        $region21: #{tpu_custom_call.1} parent=15 // pred_check
          %p221 = pneg %p92
        $region22: #{tpu_custom_call.1} parent=15 // pred_check_branch
          %223 = sbr.rel (%p221) target = $region24
        $region23: #{tpu_custom_call.1} parent=15 // pred_region
          %s224 = sand.u32 %s82, 1
          %s225 = scalar_lea.sflag [#allocation10], %s224
          %s226 = sand.u32 %s82, 1
          %s227 = smul.addr %s226, 8
          %s228 = scalar_lea.vmem [#allocation9], %s227
          %s230 = ssub.s32 128, 128
          %231 = vsyncadd %s225, %s230
          %s232 = smul.addr %s37, 2
          %s233 = sadd.s32 %s38, %s232
          %s234 = smul.addr %s233, 128
          %s235 = scalar_lea.hbm %s3, %s234
          %s237 = sshll.u32 %s228, 4
          %s238 = int_to_ptr.vmem [resolvable:$true] %s237
          %240 = dma.hbm_to_vmem [thread:$0]  %s235, 128, %s238, %s225
        $region24: #{tpu_custom_call.1} parent=15 // pred_fallthru
          _
      $region16: #{tpu_custom_call.1} parent=5 // pred_fallthru
        _
      %p241 = scmp.le.s32.totalorder 1, %s30
      %p242 = scmp.lt.s32.totalorder %s30, 5
      %p243 = pnand %p241, %p242
      %p244 = pneg %p243
      // Predicated region
      $region25: #{tpu_custom_call.1} parent=5 // pred_check
        _
      $region26: #{tpu_custom_call.1} parent=5 // pred_check_branch
        %246 = sbr.rel (%p243) target = $region28
      $region27: #{tpu_custom_call.1} parent=5 // pred_region
        %s247 = ssub.s32 %s30, 1
        %s248 = sand.u32 %s57, 1
        %s249 = scalar_lea.sflag [#allocation7], %s248
        %s250 = sand.u32 %s57, 1
        %s251 = smul.addr %s250, 8
        %s252 = scalar_lea.vmem [#allocation6], %s251
        // Predicated region
        $region29: #{tpu_custom_call.1} parent=27 // pred_check
          %p253 = pneg %p70
        $region30: #{tpu_custom_call.1} parent=27 // pred_check_branch
          %255 = sbr.rel (%p253) target = $region32
        $region31: #{tpu_custom_call.1} parent=27 // pred_region
          %256 = dma.done %s249, 128
        $region32: #{tpu_custom_call.1} parent=27 // pred_fallthru
          _
        %s257 = sand.u32 %s85, 1
        %s258 = scalar_lea.sflag [#allocation10], %s257
        %s259 = sand.u32 %s85, 1
        %s260 = smul.addr %s259, 8
        %s261 = scalar_lea.vmem [#allocation9], %s260
        // Predicated region
        $region33: #{tpu_custom_call.1} parent=27 // pred_check
          %p262 = pneg %p98
        $region34: #{tpu_custom_call.1} parent=27 // pred_check_branch
          %264 = sbr.rel (%p262) target = $region36
        $region35: #{tpu_custom_call.1} parent=27 // pred_region
          %265 = dma.done %s258, 128
        $region36: #{tpu_custom_call.1} parent=27 // pred_fallthru
          _
        %s266 = sand.u32 %s57, 1
        %s267 = scalar_lea.sflag [#allocation7], %s266
        %s268 = sand.u32 %s57, 1
        %s269 = smul.addr %s268, 8
        %s270 = scalar_lea.vmem [#allocation6], %s269
        %p271 = pneg %p70
        %p272 = pneg %p67
        %s273 = sand.u32 %s85, 1
        %s274 = scalar_lea.sflag [#allocation10], %s273
        %s275 = sand.u32 %s85, 1
        %s276 = smul.addr %s275, 8
        %s277 = scalar_lea.vmem [#allocation9], %s276
        %p278 = pneg %p98
        %p279 = pneg %p95
        %p280 = pneg %p126
        %p281 = pneg %p123
        %p282 = scmp.lt.s32.totalorder %s39, 1
        %s283 = scalar_select %p282, %s39, 1
        %p284 = scmp.lt.s32.totalorder %s40, 1
        %s285 = scalar_select %p284, %s40, 1
        %s286 = smul.addr %s283, 2
        %s287 = sadd.s32 %s285, %s286
        %s288 = scalar_lea.vmem %s4, %s287
        %p289 = pneg %p154
        %p290 = pneg %p151
        %p291 = scmp.lt.s32.totalorder %s39, 1
        %s292 = scalar_select %p291, %s39, 1
        %p293 = scmp.lt.s32.totalorder %s40, 1
        %s294 = scalar_select %p293, %s40, 1
        %s295 = smul.addr %s292, 2
        %s296 = sadd.s32 %s294, %s295
        %s297 = scalar_lea.vmem %s5, %s296
        %p298 = pneg %p182
        %p299 = pneg %p179
        %s300 = sand.u32 %s169, 1
        %s301 = scalar_lea.sflag [#allocation8], %s300
        %s302 = sand.u32 %s169, 1
        %s303 = smul.addr %s302, 32
        %s304 = scalar_lea.vmem [#allocation11], %s303
        %p305 = scmp.lt.s32.totalorder %s39, 1
        %s306 = scalar_select %p305, %s39, 1
        %p307 = scmp.lt.s32.totalorder %s40, 1
        %s308 = scalar_select %p307, %s40, 1
        %s309 = smul.addr %s306, 2
        %s310 = sadd.s32 %s308, %s309
        %s311 = scalar_lea.vmem %s4, %s310
        %p312 = scmp.lt.s32.totalorder %s39, 1
        %s313 = scalar_select %p312, %s39, 1
        %p314 = scmp.lt.s32.totalorder %s40, 1
        %s315 = scalar_select %p314, %s40, 1
        %s316 = smul.addr %s313, 2
        %s317 = sadd.s32 %s315, %s316
        %s318 = scalar_lea.vmem %s5, %s317
        %s319 = smul.u32 8, %s40
        %s322 = smul.u32 %s40, 8
        %vm323 = vcmask 130048
        %324 = vst.msk [vmem:[#allocation2] sm:$0xff] %vm323, 0.0
        %vm325 = vcmask 648192
        %326 = vst.msk [vmem:[%s304] sm:$0x3] %vm325, 0
        %327 = vst.msk [vmem:[%s304 + $0x2] sm:$0x3] %vm325, 0
        %328 = vst.msk [vmem:[%s304 + $0x4] sm:$0x3] %vm325, 0
        %329 = vst.msk [vmem:[%s304 + $0x6] sm:$0x3] %vm325, 0
        %330 = vst.msk [vmem:[%s304 + $0x8] sm:$0x3] %vm325, 0
        %331 = vst.msk [vmem:[%s304 + $0xa] sm:$0x3] %vm325, 0
        %332 = vst.msk [vmem:[%s304 + $0xc] sm:$0x3] %vm325, 0
        %333 = vst.msk [vmem:[%s304 + $0xe] sm:$0x3] %vm325, 0
        %334 = vst.msk [vmem:[%s304 + $0x10] sm:$0x3] %vm325, 0
        %335 = vst.msk [vmem:[%s304 + $0x12] sm:$0x3] %vm325, 0
        %336 = vst.msk [vmem:[%s304 + $0x14] sm:$0x3] %vm325, 0
        %337 = vst.msk [vmem:[%s304 + $0x16] sm:$0x3] %vm325, 0
        %338 = vst.msk [vmem:[%s304 + $0x18] sm:$0x3] %vm325, 0
        %339 = vst.msk [vmem:[%s304 + $0x1a] sm:$0x3] %vm325, 0
        %340 = vst.msk [vmem:[%s304 + $0x1c] sm:$0x3] %vm325, 0
        %341 = vst.msk [vmem:[%s304 + $0x1e] sm:$0x3] %vm325, 0
        %v342 = vlaneseq
        %v343 = vshrl.u32 %v342, 7
        %v344 = vstv %s322
        %v345 = vadd.s32 %v344, %v343
        %v346 = vlaneseq
        %v347 = vand.u32 %v346, 127
        loop: start=0, step=1, limit=3
        $region37: #{tpu_custom_call.1} parent=27 // loop_pre_header
          _
        $region38: #{tpu_custom_call.1} parent=27 // loop_header
          %s349 = sphi 0, %s353
          %p350 = scmp.ge.s32.totalorder %s349, 3
        $region39: #{tpu_custom_call.1} parent=27 // loop_header_branch
          %352 = sbr.rel (%p350) target = $region43
        $region40: #{tpu_custom_call.1} parent=27 // loop_body
          %s354 = smul.u32 %s39, 3
          %s355 = sadd.s32 %s354, %s349
          %s356 = smul.u32 %s355, 4
          %s357 = sld [smem:[#allocation4 + %s356]]
          %s358 = sadd.s32 %s356, 1
          %s359 = sld [smem:[#allocation4 + %s358]]
          %s360 = sadd.s32 %s356, 2
          %s361 = sld [smem:[#allocation4 + %s360]]
          %s362 = sadd.s32 %s356, 3
          %s363 = sld [smem:[#allocation4 + %s362]]
          %s364 = smul.u32 %s355, 2
          %s365 = sld [smem:[#allocation5 + %s364]]
          %s366 = sadd.s32 %s364, 1
          %s367 = sld [smem:[#allocation5 + %s366]]
          %p368 = scmp.gt.s32.totalorder %s361, %s357
          %p369 = scmp.gt.s32.totalorder %s363, %s359
          %p370 = pnand %p368, %p369
          %p371 = pneg %p370
          %p372 = scmp.gt.s32.totalorder %s363, %s322
          %p373 = pnand %p371, %p372
          %p374 = pneg %p373
          %s375 = sadd.s32 %s322, 8
          %p376 = scmp.lt.s32.totalorder %s359, %s375
          %p377 = pnand %p374, %p376
          %p378 = pneg %p377
          // Predicated region
          $region44: #{tpu_custom_call.1} parent=40 // pred_check
            _
          $region45: #{tpu_custom_call.1} parent=40 // pred_check_branch
            %380 = sbr.rel (%p377) target = $region47
          $region46: #{tpu_custom_call.1} parent=40 // pred_region
            %v381 = vstv %s359
            %vm382 = vcmp.ge.s32.totalorder %v345, %v381
            %v383 = vstv %s363
            %vm384 = vcmp.lt.s32.totalorder %v345, %v383
            %vm385 = vmand %vm382, %vm384
            %v386 = vstv %s357
            %vm387 = vcmp.ge.s32.totalorder %v347, %v386
            %v388 = vstv %s361
            %vm389 = vcmp.lt.s32.totalorder %v347, %v388
            %vm390 = vmand %vm387, %vm389
            %v391 = vsel %vm385, 1, 0
            %vm392 = vcmp.eq.s32.totalorder %v391, 1
            %v393 = vsel %vm390, 1, 0
            %vm394 = vcmp.eq.s32.totalorder %v393, 1
            %vm395 = vmand %vm392, %vm394
            %v396 = vsel %vm395, 1, 0
            %v397 = vcvt.s32.f32 %v396
            %v398 = vld [vmem:[#allocation2] sm:$0xff]
            %v399 = vmax.f32 %v398, %v397
            %400 = vst.msk [vmem:[#allocation2] sm:$0xff] %vm323, %v399
            %p401 = scmp.gt.s32.totalorder %s367, %s365
            // Predicated region
            $region48: #{tpu_custom_call.1} parent=46 // pred_check
              %p402 = pneg %p401
            $region49: #{tpu_custom_call.1} parent=46 // pred_check_branch
              %404 = sbr.rel (%p402) target = $region51
            $region50: #{tpu_custom_call.1} parent=46 // pred_region
              %v405 = vlaneseq
              %v406 = vshrl.u32 %v405, 7
              %v407 = vsub.s32 0, %v406
              %v408 = vrot.slane %v397, %v407
              %410 = vbcast.lane.b32.xlu0 %v408, 256
              %v411 = vpop.permute.xlu0 %410
              %s413 = sor.u32 256, 8
              %414 = vbcast.lane.b32.xlu0 %v408, %s413
              %v415 = vpop.permute.xlu0 %414
              %v416 = vlaneseq
              %v417 = vshrl.u32 %v416, 7
              %v418 = vsub.s32 1, %v417
              %v419 = vrot.slane %v397, %v418
              %421 = vbcast.lane.b32.xlu0 %v419, 256
              %v422 = vpop.permute.xlu0 %421
              %s424 = sor.u32 256, 8
              %425 = vbcast.lane.b32.xlu0 %v419, %s424
              %v426 = vpop.permute.xlu0 %425
              %v427 = vlaneseq
              %v428 = vshrl.u32 %v427, 7
              %v429 = vsub.s32 2, %v428
              %v430 = vrot.slane %v397, %v429
              %432 = vbcast.lane.b32.xlu0 %v430, 256
              %v433 = vpop.permute.xlu0 %432
              %s435 = sor.u32 256, 8
              %436 = vbcast.lane.b32.xlu0 %v430, %s435
              %v437 = vpop.permute.xlu0 %436
              %v438 = vlaneseq
              %v439 = vshrl.u32 %v438, 7
              %v440 = vsub.s32 3, %v439
              %v441 = vrot.slane %v397, %v440
              %443 = vbcast.lane.b32.xlu0 %v441, 256
              %v444 = vpop.permute.xlu0 %443
              %s446 = sor.u32 256, 8
              %447 = vbcast.lane.b32.xlu0 %v441, %s446
              %v448 = vpop.permute.xlu0 %447
              %v449 = vlaneseq
              %v450 = vshrl.u32 %v449, 7
              %v451 = vsub.s32 4, %v450
              %v452 = vrot.slane %v397, %v451
              %454 = vbcast.lane.b32.xlu0 %v452, 256
              %v455 = vpop.permute.xlu0 %454
              %s457 = sor.u32 256, 8
              %458 = vbcast.lane.b32.xlu0 %v452, %s457
              %v459 = vpop.permute.xlu0 %458
              %v460 = vlaneseq
              %v461 = vshrl.u32 %v460, 7
              %v462 = vsub.s32 5, %v461
              %v463 = vrot.slane %v397, %v462
              %465 = vbcast.lane.b32.xlu0 %v463, 256
              %v466 = vpop.permute.xlu0 %465
              %s468 = sor.u32 256, 8
              %469 = vbcast.lane.b32.xlu0 %v463, %s468
              %v470 = vpop.permute.xlu0 %469
              %v471 = vlaneseq
              %v472 = vshrl.u32 %v471, 7
              %v473 = vsub.s32 6, %v472
              %v474 = vrot.slane %v397, %v473
              %476 = vbcast.lane.b32.xlu0 %v474, 256
              %v477 = vpop.permute.xlu0 %476
              %s479 = sor.u32 256, 8
              %480 = vbcast.lane.b32.xlu0 %v474, %s479
              %v481 = vpop.permute.xlu0 %480
              %v482 = vlaneseq
              %v483 = vshrl.u32 %v482, 7
              %v484 = vsub.s32 7, %v483
              %v485 = vrot.slane %v397, %v484
              %487 = vbcast.lane.b32.xlu0 %v485, 256
              %v488 = vpop.permute.xlu0 %487
              %s490 = sor.u32 256, 8
              %491 = vbcast.lane.b32.xlu0 %v485, %s490
              %v492 = vpop.permute.xlu0 %491
              %vm493 = vcmp.gt.f32.partialorder %v411, 0.0
              %vm494 = vcmp.gt.f32.partialorder %v415, 0.0
              %vm495 = vcmp.gt.f32.partialorder %v422, 0.0
              %vm496 = vcmp.gt.f32.partialorder %v426, 0.0
              %vm497 = vcmp.gt.f32.partialorder %v433, 0.0
              %vm498 = vcmp.gt.f32.partialorder %v437, 0.0
              %vm499 = vcmp.gt.f32.partialorder %v444, 0.0
              %vm500 = vcmp.gt.f32.partialorder %v448, 0.0
              %vm501 = vcmp.gt.f32.partialorder %v455, 0.0
              %vm502 = vcmp.gt.f32.partialorder %v459, 0.0
              %vm503 = vcmp.gt.f32.partialorder %v466, 0.0
              %vm504 = vcmp.gt.f32.partialorder %v470, 0.0
              %vm505 = vcmp.gt.f32.partialorder %v477, 0.0
              %vm506 = vcmp.gt.f32.partialorder %v481, 0.0
              %vm507 = vcmp.gt.f32.partialorder %v488, 0.0
              %vm508 = vcmp.gt.f32.partialorder %v492, 0.0
              %v509 = vstv %s365
              %vm510 = vcmp.ge.s32.totalorder %v347, %v509
              %v511 = vstv %s367
              %vm512 = vcmp.lt.s32.totalorder %v347, %v511
              %vm513 = vmand %vm510, %vm512
              %v514 = vsel %vm493, 1, 0
              %v515 = vsel %vm494, 1, 0
              %v516 = vsel %vm495, 1, 0
              %v517 = vsel %vm496, 1, 0
              %v518 = vsel %vm497, 1, 0
              %v519 = vsel %vm498, 1, 0
              %v520 = vsel %vm499, 1, 0
              %v521 = vsel %vm500, 1, 0
              %v522 = vsel %vm501, 1, 0
              %v523 = vsel %vm502, 1, 0
              %v524 = vsel %vm503, 1, 0
              %v525 = vsel %vm504, 1, 0
              %v526 = vsel %vm505, 1, 0
              %v527 = vsel %vm506, 1, 0
              %v528 = vsel %vm507, 1, 0
              %v529 = vsel %vm508, 1, 0
              %vm530 = vcmp.eq.s32.totalorder %v514, 1
              %vm531 = vcmp.eq.s32.totalorder %v515, 1
              %vm532 = vcmp.eq.s32.totalorder %v516, 1
              %vm533 = vcmp.eq.s32.totalorder %v517, 1
              %vm534 = vcmp.eq.s32.totalorder %v518, 1
              %vm535 = vcmp.eq.s32.totalorder %v519, 1
              %vm536 = vcmp.eq.s32.totalorder %v520, 1
              %vm537 = vcmp.eq.s32.totalorder %v521, 1
              %vm538 = vcmp.eq.s32.totalorder %v522, 1
              %vm539 = vcmp.eq.s32.totalorder %v523, 1
              %vm540 = vcmp.eq.s32.totalorder %v524, 1
              %vm541 = vcmp.eq.s32.totalorder %v525, 1
              %vm542 = vcmp.eq.s32.totalorder %v526, 1
              %vm543 = vcmp.eq.s32.totalorder %v527, 1
              %vm544 = vcmp.eq.s32.totalorder %v528, 1
              %vm545 = vcmp.eq.s32.totalorder %v529, 1
              %v546 = vsel %vm513, 1, 0
              %vm547 = vcmp.eq.s32.totalorder %v546, 1
              %vm548 = vmand %vm530, %vm547
              %vm549 = vmand %vm531, %vm547
              %vm550 = vmand %vm532, %vm547
              %vm551 = vmand %vm533, %vm547
              %vm552 = vmand %vm534, %vm547
              %vm553 = vmand %vm535, %vm547
              %vm554 = vmand %vm536, %vm547
              %vm555 = vmand %vm537, %vm547
              %vm556 = vmand %vm538, %vm547
              %vm557 = vmand %vm539, %vm547
              %vm558 = vmand %vm540, %vm547
              %vm559 = vmand %vm541, %vm547
              %vm560 = vmand %vm542, %vm547
              %vm561 = vmand %vm543, %vm547
              %vm562 = vmand %vm544, %vm547
              %vm563 = vmand %vm545, %vm547
              %v564 = vld [vmem:[%s304] sm:$0x3]
              %v565 = vld [vmem:[%s304 + $0x2] sm:$0x3]
              %v566 = vld [vmem:[%s304 + $0x4] sm:$0x3]
              %v567 = vld [vmem:[%s304 + $0x6] sm:$0x3]
              %v568 = vld [vmem:[%s304 + $0x8] sm:$0x3]
              %v569 = vld [vmem:[%s304 + $0xa] sm:$0x3]
              %v570 = vld [vmem:[%s304 + $0xc] sm:$0x3]
              %v571 = vld [vmem:[%s304 + $0xe] sm:$0x3]
              %v572 = vld [vmem:[%s304 + $0x10] sm:$0x3]
              %v573 = vld [vmem:[%s304 + $0x12] sm:$0x3]
              %v574 = vld [vmem:[%s304 + $0x14] sm:$0x3]
              %v575 = vld [vmem:[%s304 + $0x16] sm:$0x3]
              %v576 = vld [vmem:[%s304 + $0x18] sm:$0x3]
              %v577 = vld [vmem:[%s304 + $0x1a] sm:$0x3]
              %v578 = vld [vmem:[%s304 + $0x1c] sm:$0x3]
              %v579 = vld [vmem:[%s304 + $0x1e] sm:$0x3]
              %vm580 = vmpackc.low %vm548, %vm548
              %vm581 = vmpackc.even %vm580, %vm580
              %vm582 = vmpackc.low %vm549, %vm549
              %vm583 = vmpackc.even %vm582, %vm582
              %vm584 = vmpackc.low %vm550, %vm550
              %vm585 = vmpackc.even %vm584, %vm584
              %vm586 = vmpackc.low %vm551, %vm551
              %vm587 = vmpackc.even %vm586, %vm586
              %vm588 = vmpackc.low %vm552, %vm552
              %vm589 = vmpackc.even %vm588, %vm588
              %vm590 = vmpackc.low %vm553, %vm553
              %vm591 = vmpackc.even %vm590, %vm590
              %vm592 = vmpackc.low %vm554, %vm554
              %vm593 = vmpackc.even %vm592, %vm592
              %vm594 = vmpackc.low %vm555, %vm555
              %vm595 = vmpackc.even %vm594, %vm594
              %vm596 = vmpackc.low %vm556, %vm556
              %vm597 = vmpackc.even %vm596, %vm596
              %vm598 = vmpackc.low %vm557, %vm557
              %vm599 = vmpackc.even %vm598, %vm598
              %vm600 = vmpackc.low %vm558, %vm558
              %vm601 = vmpackc.even %vm600, %vm600
              %vm602 = vmpackc.low %vm559, %vm559
              %vm603 = vmpackc.even %vm602, %vm602
              %vm604 = vmpackc.low %vm560, %vm560
              %vm605 = vmpackc.even %vm604, %vm604
              %vm606 = vmpackc.low %vm561, %vm561
              %vm607 = vmpackc.even %vm606, %vm606
              %vm608 = vmpackc.low %vm562, %vm562
              %vm609 = vmpackc.even %vm608, %vm608
              %vm610 = vmpackc.low %vm563, %vm563
              %vm611 = vmpackc.even %vm610, %vm610
              %v612 = vsel %vm581, 16843009, %v564
              %v613 = vsel %vm583, 16843009, %v565
              %v614 = vsel %vm585, 16843009, %v566
              %v615 = vsel %vm587, 16843009, %v567
              %v616 = vsel %vm589, 16843009, %v568
              %v617 = vsel %vm591, 16843009, %v569
              %v618 = vsel %vm593, 16843009, %v570
              %v619 = vsel %vm595, 16843009, %v571
              %v620 = vsel %vm597, 16843009, %v572
              %v621 = vsel %vm599, 16843009, %v573
              %v622 = vsel %vm601, 16843009, %v574
              %v623 = vsel %vm603, 16843009, %v575
              %v624 = vsel %vm605, 16843009, %v576
              %v625 = vsel %vm607, 16843009, %v577
              %v626 = vsel %vm609, 16843009, %v578
              %v627 = vsel %vm611, 16843009, %v579
              %628 = vst.msk [vmem:[%s304] sm:$0x3] %vm325, %v612
              %629 = vst.msk [vmem:[%s304 + $0x2] sm:$0x3] %vm325, %v613
              %630 = vst.msk [vmem:[%s304 + $0x4] sm:$0x3] %vm325, %v614
              %631 = vst.msk [vmem:[%s304 + $0x6] sm:$0x3] %vm325, %v615
              %632 = vst.msk [vmem:[%s304 + $0x8] sm:$0x3] %vm325, %v616
              %633 = vst.msk [vmem:[%s304 + $0xa] sm:$0x3] %vm325, %v617
              %634 = vst.msk [vmem:[%s304 + $0xc] sm:$0x3] %vm325, %v618
              %635 = vst.msk [vmem:[%s304 + $0xe] sm:$0x3] %vm325, %v619
              %636 = vst.msk [vmem:[%s304 + $0x10] sm:$0x3] %vm325, %v620
              %637 = vst.msk [vmem:[%s304 + $0x12] sm:$0x3] %vm325, %v621
              %638 = vst.msk [vmem:[%s304 + $0x14] sm:$0x3] %vm325, %v622
              %639 = vst.msk [vmem:[%s304 + $0x16] sm:$0x3] %vm325, %v623
              %640 = vst.msk [vmem:[%s304 + $0x18] sm:$0x3] %vm325, %v624
              %641 = vst.msk [vmem:[%s304 + $0x1a] sm:$0x3] %vm325, %v625
              %642 = vst.msk [vmem:[%s304 + $0x1c] sm:$0x3] %vm325, %v626
              %643 = vst.msk [vmem:[%s304 + $0x1e] sm:$0x3] %vm325, %v627
            $region51: #{tpu_custom_call.1} parent=46 // pred_fallthru
              _
          $region47: #{tpu_custom_call.1} parent=40 // pred_fallthru
            _
        $region41: #{tpu_custom_call.1} parent=27 // loop_footer
          %s353 = sadd.s32 1, %s349
        $region42: #{tpu_custom_call.1} parent=27 // loop_footer_branch
          %348 = sbr.rel target = $region38
        $region43: #{tpu_custom_call.1} parent=27 // loop_exit
          _
        %v644 = vld [vmem:[%s261] sm:$0xff]
        %vm645 = vcmp.ne.f32.partialorder %v644, 80.0
        %vm646 = vcmp.eq.f32.partialorder %v644, %v644
        %vm647 = vmand %vm645, %vm646
        %v648 = vsel %vm647, 1, 0
        %v649 = vlaneseq
        %v650 = vshrl.u32 %v649, 7
        %v651 = vsub.s32 0, %v650
        %v652 = vrot.slane %v648, %v651
        %654 = vbcast.lane.b32.xlu0 %v652, 256
        %v655 = vpop.permute.xlu0 %654
        %s657 = sor.u32 256, 8
        %658 = vbcast.lane.b32.xlu0 %v652, %s657
        %v659 = vpop.permute.xlu0 %658
        %v660 = vlaneseq
        %v661 = vshrl.u32 %v660, 7
        %v662 = vsub.s32 1, %v661
        %v663 = vrot.slane %v648, %v662
        %665 = vbcast.lane.b32.xlu0 %v663, 256
        %v666 = vpop.permute.xlu0 %665
        %s668 = sor.u32 256, 8
        %669 = vbcast.lane.b32.xlu0 %v663, %s668
        %v670 = vpop.permute.xlu0 %669
        %v671 = vlaneseq
        %v672 = vshrl.u32 %v671, 7
        %v673 = vsub.s32 2, %v672
        %v674 = vrot.slane %v648, %v673
        %676 = vbcast.lane.b32.xlu0 %v674, 256
        %v677 = vpop.permute.xlu0 %676
        %s679 = sor.u32 256, 8
        %680 = vbcast.lane.b32.xlu0 %v674, %s679
        %v681 = vpop.permute.xlu0 %680
        %v682 = vlaneseq
        %v683 = vshrl.u32 %v682, 7
        %v684 = vsub.s32 3, %v683
        %v685 = vrot.slane %v648, %v684
        %687 = vbcast.lane.b32.xlu0 %v685, 256
        %v688 = vpop.permute.xlu0 %687
        %s690 = sor.u32 256, 8
        %691 = vbcast.lane.b32.xlu0 %v685, %s690
        %v692 = vpop.permute.xlu0 %691
        %v693 = vlaneseq
        %v694 = vshrl.u32 %v693, 7
        %v695 = vsub.s32 4, %v694
        %v696 = vrot.slane %v648, %v695
        %698 = vbcast.lane.b32.xlu0 %v696, 256
        %v699 = vpop.permute.xlu0 %698
        %s701 = sor.u32 256, 8
        %702 = vbcast.lane.b32.xlu0 %v696, %s701
        %v703 = vpop.permute.xlu0 %702
        %v704 = vlaneseq
        %v705 = vshrl.u32 %v704, 7
        %v706 = vsub.s32 5, %v705
        %v707 = vrot.slane %v648, %v706
        %709 = vbcast.lane.b32.xlu0 %v707, 256
        %v710 = vpop.permute.xlu0 %709
        %s712 = sor.u32 256, 8
        %713 = vbcast.lane.b32.xlu0 %v707, %s712
        %v714 = vpop.permute.xlu0 %713
        %v715 = vlaneseq
        %v716 = vshrl.u32 %v715, 7
        %v717 = vsub.s32 6, %v716
        %v718 = vrot.slane %v648, %v717
        %720 = vbcast.lane.b32.xlu0 %v718, 256
        %v721 = vpop.permute.xlu0 %720
        %s723 = sor.u32 256, 8
        %724 = vbcast.lane.b32.xlu0 %v718, %s723
        %v725 = vpop.permute.xlu0 %724
        %v726 = vlaneseq
        %v727 = vshrl.u32 %v726, 7
        %v728 = vsub.s32 7, %v727
        %v729 = vrot.slane %v648, %v728
        %731 = vbcast.lane.b32.xlu0 %v729, 256
        %v732 = vpop.permute.xlu0 %731
        %s734 = sor.u32 256, 8
        %735 = vbcast.lane.b32.xlu0 %v729, %s734
        %v736 = vpop.permute.xlu0 %735
        %vm737 = vcmp.ne.s32.totalorder %v655, 0
        %vm738 = vcmp.ne.s32.totalorder %v659, 0
        %vm739 = vcmp.ne.s32.totalorder %v666, 0
        %vm740 = vcmp.ne.s32.totalorder %v670, 0
        %vm741 = vcmp.ne.s32.totalorder %v677, 0
        %vm742 = vcmp.ne.s32.totalorder %v681, 0
        %vm743 = vcmp.ne.s32.totalorder %v688, 0
        %vm744 = vcmp.ne.s32.totalorder %v692, 0
        %vm745 = vcmp.ne.s32.totalorder %v699, 0
        %vm746 = vcmp.ne.s32.totalorder %v703, 0
        %vm747 = vcmp.ne.s32.totalorder %v710, 0
        %vm748 = vcmp.ne.s32.totalorder %v714, 0
        %vm749 = vcmp.ne.s32.totalorder %v721, 0
        %vm750 = vcmp.ne.s32.totalorder %v725, 0
        %vm751 = vcmp.ne.s32.totalorder %v732, 0
        %vm752 = vcmp.ne.s32.totalorder %v736, 0
        %v753 = vld [vmem:[%s304] sm:$0x3]
        %v754 = vld [vmem:[%s304 + $0x2] sm:$0x3]
        %v755 = vld [vmem:[%s304 + $0x4] sm:$0x3]
        %v756 = vld [vmem:[%s304 + $0x6] sm:$0x3]
        %v757 = vld [vmem:[%s304 + $0x8] sm:$0x3]
        %v758 = vld [vmem:[%s304 + $0xa] sm:$0x3]
        %v759 = vld [vmem:[%s304 + $0xc] sm:$0x3]
        %v760 = vld [vmem:[%s304 + $0xe] sm:$0x3]
        %v761 = vld [vmem:[%s304 + $0x10] sm:$0x3]
        %v762 = vld [vmem:[%s304 + $0x12] sm:$0x3]
        %v763 = vld [vmem:[%s304 + $0x14] sm:$0x3]
        %v764 = vld [vmem:[%s304 + $0x16] sm:$0x3]
        %v765 = vld [vmem:[%s304 + $0x18] sm:$0x3]
        %v766 = vld [vmem:[%s304 + $0x1a] sm:$0x3]
        %v767 = vld [vmem:[%s304 + $0x1c] sm:$0x3]
        %v768 = vld [vmem:[%s304 + $0x1e] sm:$0x3]
        %v769 = vsel %vm737, 1, 0
        %v770 = vsel %vm738, 1, 0
        %v771 = vsel %vm739, 1, 0
        %v772 = vsel %vm740, 1, 0
        %v773 = vsel %vm741, 1, 0
        %v774 = vsel %vm742, 1, 0
        %v775 = vsel %vm743, 1, 0
        %v776 = vsel %vm744, 1, 0
        %v777 = vsel %vm745, 1, 0
        %v778 = vsel %vm746, 1, 0
        %v779 = vsel %vm747, 1, 0
        %v780 = vsel %vm748, 1, 0
        %v781 = vsel %vm749, 1, 0
        %v782 = vsel %vm750, 1, 0
        %v783 = vsel %vm751, 1, 0
        %v784 = vsel %vm752, 1, 0
        %vm785 = vcmp.eq.s32.totalorder %v769, 1
        %vm786 = vcmp.eq.s32.totalorder %v770, 1
        %vm787 = vcmp.eq.s32.totalorder %v771, 1
        %vm788 = vcmp.eq.s32.totalorder %v772, 1
        %vm789 = vcmp.eq.s32.totalorder %v773, 1
        %vm790 = vcmp.eq.s32.totalorder %v774, 1
        %vm791 = vcmp.eq.s32.totalorder %v775, 1
        %vm792 = vcmp.eq.s32.totalorder %v776, 1
        %vm793 = vcmp.eq.s32.totalorder %v777, 1
        %vm794 = vcmp.eq.s32.totalorder %v778, 1
        %vm795 = vcmp.eq.s32.totalorder %v779, 1
        %vm796 = vcmp.eq.s32.totalorder %v780, 1
        %vm797 = vcmp.eq.s32.totalorder %v781, 1
        %vm798 = vcmp.eq.s32.totalorder %v782, 1
        %vm799 = vcmp.eq.s32.totalorder %v783, 1
        %vm800 = vcmp.eq.s32.totalorder %v784, 1
        %vm801 = vmpackc.low %vm785, %vm785
        %vm802 = vmpackc.even %vm801, %vm801
        %vm803 = vmpackc.low %vm786, %vm786
        %vm804 = vmpackc.even %vm803, %vm803
        %vm805 = vmpackc.low %vm787, %vm787
        %vm806 = vmpackc.even %vm805, %vm805
        %vm807 = vmpackc.low %vm788, %vm788
        %vm808 = vmpackc.even %vm807, %vm807
        %vm809 = vmpackc.low %vm789, %vm789
        %vm810 = vmpackc.even %vm809, %vm809
        %vm811 = vmpackc.low %vm790, %vm790
        %vm812 = vmpackc.even %vm811, %vm811
        %vm813 = vmpackc.low %vm791, %vm791
        %vm814 = vmpackc.even %vm813, %vm813
        %vm815 = vmpackc.low %vm792, %vm792
        %vm816 = vmpackc.even %vm815, %vm815
        %vm817 = vmpackc.low %vm793, %vm793
        %vm818 = vmpackc.even %vm817, %vm817
        %vm819 = vmpackc.low %vm794, %vm794
        %vm820 = vmpackc.even %vm819, %vm819
        %vm821 = vmpackc.low %vm795, %vm795
        %vm822 = vmpackc.even %vm821, %vm821
        %vm823 = vmpackc.low %vm796, %vm796
        %vm824 = vmpackc.even %vm823, %vm823
        %vm825 = vmpackc.low %vm797, %vm797
        %vm826 = vmpackc.even %vm825, %vm825
        %vm827 = vmpackc.low %vm798, %vm798
        %vm828 = vmpackc.even %vm827, %vm827
        %vm829 = vmpackc.low %vm799, %vm799
        %vm830 = vmpackc.even %vm829, %vm829
        %vm831 = vmpackc.low %vm800, %vm800
        %vm832 = vmpackc.even %vm831, %vm831
        %v833 = vsel %vm802, %v753, 0
        %v834 = vsel %vm804, %v754, 0
        %v835 = vsel %vm806, %v755, 0
        %v836 = vsel %vm808, %v756, 0
        %v837 = vsel %vm810, %v757, 0
        %v838 = vsel %vm812, %v758, 0
        %v839 = vsel %vm814, %v759, 0
        %v840 = vsel %vm816, %v760, 0
        %v841 = vsel %vm818, %v761, 0
        %v842 = vsel %vm820, %v762, 0
        %v843 = vsel %vm822, %v763, 0
        %v844 = vsel %vm824, %v764, 0
        %v845 = vsel %vm826, %v765, 0
        %v846 = vsel %vm828, %v766, 0
        %v847 = vsel %vm830, %v767, 0
        %v848 = vsel %vm832, %v768, 0
        %849 = vst.msk [vmem:[%s304] sm:$0x3] %vm325, %v833
        %850 = vst.msk [vmem:[%s304 + $0x2] sm:$0x3] %vm325, %v834
        %851 = vst.msk [vmem:[%s304 + $0x4] sm:$0x3] %vm325, %v835
        %852 = vst.msk [vmem:[%s304 + $0x6] sm:$0x3] %vm325, %v836
        %853 = vst.msk [vmem:[%s304 + $0x8] sm:$0x3] %vm325, %v837
        %854 = vst.msk [vmem:[%s304 + $0xa] sm:$0x3] %vm325, %v838
        %855 = vst.msk [vmem:[%s304 + $0xc] sm:$0x3] %vm325, %v839
        %856 = vst.msk [vmem:[%s304 + $0xe] sm:$0x3] %vm325, %v840
        %857 = vst.msk [vmem:[%s304 + $0x10] sm:$0x3] %vm325, %v841
        %858 = vst.msk [vmem:[%s304 + $0x12] sm:$0x3] %vm325, %v842
        %859 = vst.msk [vmem:[%s304 + $0x14] sm:$0x3] %vm325, %v843
        %860 = vst.msk [vmem:[%s304 + $0x16] sm:$0x3] %vm325, %v844
        %861 = vst.msk [vmem:[%s304 + $0x18] sm:$0x3] %vm325, %v845
        %862 = vst.msk [vmem:[%s304 + $0x1a] sm:$0x3] %vm325, %v846
        %863 = vst.msk [vmem:[%s304 + $0x1c] sm:$0x3] %vm325, %v847
        %864 = vst.msk [vmem:[%s304 + $0x1e] sm:$0x3] %vm325, %v848
        %v865 = vld [vmem:[%s252] sm:$0xff]
        %v866 = vld [vmem:[#allocation2] sm:$0xff]
        %v867 = vmul.f32 %v866, %v865
        %v868 = vsel %vm323, %v867, 0.0
        %869 = vadd.xlane.f32.xlu0 %v868
        %v870 = vpop.xlane.xlu0 %869
        %v871 = vrot.slane %v870, 4
        %v872 = vadd.f32 %v870, %v871
        %v873 = vrot.slane %v872, 2
        %v874 = vadd.f32 %v872, %v873
        %v875 = vrot.slane %v874, 1
        %v876 = vadd.f32 %v874, %v875
        %s877 = vtos %v876
        %v878 = vsel %vm323, %v865, 0.0
        %879 = vadd.xlane.f32.xlu0 %v878
        %v880 = vpop.xlane.xlu0 %879
        %v881 = vrot.slane %v880, 4
        %v882 = vadd.f32 %v880, %v881
        %v883 = vrot.slane %v882, 2
        %v884 = vadd.f32 %v882, %v883
        %v885 = vrot.slane %v884, 1
        %v886 = vadd.f32 %v884, %v885
        %s887 = vtos %v886
        %s888 = ssub.f32 %s887, %s877
        %s889 = smul.f32 %s877, 13.0
        %v890 = vstv %s889
        %v891 = vadd.f32 %v890, 0.0
        %vm892 = vcmask 0
        %893 = vst.msk [vmem:[%s311] sm:$0x1] %vm892, %v891
        %v894 = vstv %s888
        %v895 = vadd.f32 %v894, 0.0
        %896 = vst.msk [vmem:[%s318] sm:$0x1] %vm892, %v895
        %p897 = scmp.lt.s32.totalorder %s39, 1
        %s898 = scalar_select %p897, %s39, 1
        %p899 = scmp.lt.s32.totalorder %s40, 1
        %s900 = scalar_select %p899, %s40, 1
        %s901 = smul.addr %s898, 2
        %s902 = sadd.s32 %s900, %s901
        %s903 = scalar_lea.vmem %s4, %s902
        %p904 = scmp.lt.s32.totalorder %s39, 1
        %s905 = scalar_select %p904, %s39, 1
        %p906 = scmp.lt.s32.totalorder %s40, 1
        %s907 = scalar_select %p906, %s40, 1
        %s908 = smul.addr %s905, 2
        %s909 = sadd.s32 %s907, %s908
        %s910 = scalar_lea.vmem %s5, %s909
        %s911 = sand.u32 %s169, 1
        %s912 = scalar_lea.sflag [#allocation8], %s911
        %s913 = sand.u32 %s169, 1
        %s914 = smul.addr %s913, 32
        %s915 = scalar_lea.vmem [#allocation11], %s914
        // Predicated region
        $region52: #{tpu_custom_call.1} parent=27 // pred_check
          %p916 = pneg %p123
        $region53: #{tpu_custom_call.1} parent=27 // pred_check_branch
          %918 = sbr.rel (%p916) target = $region55
        $region54: #{tpu_custom_call.1} parent=27 // pred_region
          _
        $region55: #{tpu_custom_call.1} parent=27 // pred_fallthru
          _
        // Predicated region
        $region56: #{tpu_custom_call.1} parent=27 // pred_check
          %p919 = pneg %p151
        $region57: #{tpu_custom_call.1} parent=27 // pred_check_branch
          %921 = sbr.rel (%p919) target = $region59
        $region58: #{tpu_custom_call.1} parent=27 // pred_region
          _
        $region59: #{tpu_custom_call.1} parent=27 // pred_fallthru
          _
        // Predicated region
        $region60: #{tpu_custom_call.1} parent=27 // pred_check
          %p922 = pneg %p179
        $region61: #{tpu_custom_call.1} parent=27 // pred_check_branch
          %924 = sbr.rel (%p922) target = $region63
        $region62: #{tpu_custom_call.1} parent=27 // pred_region
          %s925 = smul.u32 8, %s40
          %s927 = ssub.s32 512, 512
          %928 = vsyncadd %s912, %s927
          %s929 = smul.addr %s925, 2
          %s930 = smul.addr %s39, 32
          %s931 = sadd.s32 %s929, %s930
          %s932 = smul.addr %s931, 32
          %s933 = scalar_lea.hbm %s6, %s932
          %s934 = sshll.u32 %s915, 4
          %s935 = int_to_ptr.vmem [resolvable:$true] %s934
          %940 = dma.vmem_to_hbm [thread:$0]  %s935, 512, %s933, %s912, 32, 32, 2
        $region63: #{tpu_custom_call.1} parent=27 // pred_fallthru
          _
      $region28: #{tpu_custom_call.1} parent=5 // pred_fallthru
        _
      %p941 = scmp.le.s32.totalorder 2, %s30
      // Predicated region
      $region64: #{tpu_custom_call.1} parent=5 // pred_check
        %p942 = pneg %p941
      $region65: #{tpu_custom_call.1} parent=5 // pred_check_branch
        %944 = sbr.rel (%p942) target = $region67
      $region66: #{tpu_custom_call.1} parent=5 // pred_region
        %s945 = ssub.s32 %s30, 2
        // Predicated region
        $region68: #{tpu_custom_call.1} parent=66 // pred_check
          %p946 = pneg %p129
        $region69: #{tpu_custom_call.1} parent=66 // pred_check_branch
          %948 = sbr.rel (%p946) target = $region71
        $region70: #{tpu_custom_call.1} parent=66 // pred_region
          %p949 = scmp.lt.s32.totalorder %s41, 1
          %s950 = scalar_select %p949, %s41, 1
          %p951 = scmp.lt.s32.totalorder %s42, 1
          %s952 = scalar_select %p951, %s42, 1
          %s953 = smul.addr %s950, 2
          %s954 = sadd.s32 %s952, %s953
          %s955 = scalar_lea.vmem %s4, %s954
        $region71: #{tpu_custom_call.1} parent=66 // pred_fallthru
          _
        // Predicated region
        $region72: #{tpu_custom_call.1} parent=66 // pred_check
          %p956 = pneg %p157
        $region73: #{tpu_custom_call.1} parent=66 // pred_check_branch
          %958 = sbr.rel (%p956) target = $region75
        $region74: #{tpu_custom_call.1} parent=66 // pred_region
          %p959 = scmp.lt.s32.totalorder %s41, 1
          %s960 = scalar_select %p959, %s41, 1
          %p961 = scmp.lt.s32.totalorder %s42, 1
          %s962 = scalar_select %p961, %s42, 1
          %s963 = smul.addr %s960, 2
          %s964 = sadd.s32 %s962, %s963
          %s965 = scalar_lea.vmem %s5, %s964
        $region75: #{tpu_custom_call.1} parent=66 // pred_fallthru
          _
        // Predicated region
        $region76: #{tpu_custom_call.1} parent=66 // pred_check
          %p966 = pneg %p185
        $region77: #{tpu_custom_call.1} parent=66 // pred_check_branch
          %968 = sbr.rel (%p966) target = $region79
        $region78: #{tpu_custom_call.1} parent=66 // pred_region
          %s969 = sand.u32 %s170, 1
          %s970 = scalar_lea.sflag [#allocation8], %s969
          %s971 = sand.u32 %s170, 1
          %s972 = smul.addr %s971, 32
          %s973 = scalar_lea.vmem [#allocation11], %s972
          %974 = dma.done %s970, 512
        $region79: #{tpu_custom_call.1} parent=66 // pred_fallthru
          _
      $region67: #{tpu_custom_call.1} parent=5 // pred_fallthru
        _
    $region6: #{tpu_custom_call.1} parent=1 // loop_footer
      %s34 = sadd.s32 1, %s30
    $region7: #{tpu_custom_call.1} parent=1 // loop_footer_branch
      %29 = sbr.rel target = $region3
    $region8: #{tpu_custom_call.1} parent=1 // loop_exit
      _
    %975 = vsyncpa [#allocation7], 1
    %s976 = scalar_lea.sflag [#allocation7], 1
    %977 = vsyncpa %s976, 1
    %978 = vsyncpa [#allocation10], 1
    %s979 = scalar_lea.sflag [#allocation10], 1
    %980 = vsyncpa %s979, 1
    %981 = vsyncpa [#allocation8], 1
    %s982 = scalar_lea.sflag [#allocation8], 1
    %983 = vsyncpa %s982, 1

</llo_original>
